<compile_context>
chip_gen: v7x
topology: tpu7x:2x2x1
jax: 0.10.0
libtpu: 0.0.40
codegen_flags: <defaults>
</compile_context>

<pallas_src>
import math

import jax
import jax.numpy as jnp
from jax.experimental import pallas as pl
from jax.experimental.pallas import tpu as pltpu


def _round_up(x: int, m: int) -> int:
    return ((x + m - 1) // m) * m


def _cdiv(a: int, b: int) -> int:
    return -(-a // b)


# --------------------------------------------------------------------------- #
# Kernels
# --------------------------------------------------------------------------- #
def _linear_bias_single_block_kernel(h_ref, w_ref, b_ref, o_ref):
    # Whole problem in a single (1,1,1) grid step: no scratch, no phases.
    acc = jnp.dot(h_ref[...], w_ref[...], preferred_element_type=jnp.float32)
    o_ref[...] = (acc + b_ref[...].astype(jnp.float32)).astype(o_ref.dtype)


def _linear_bias_tiled_kernel(h_ref, w_ref, b_ref, o_ref, acc_ref):
    # h_ref: (tm, tk)  activations (bf16)
    # w_ref: (tk, tn)  weight, pre-transposed to (K, N) at prep time (bf16)
    # b_ref: (1,  tn)  bias (f32)
    # o_ref: (tm, tn)  output tile
    # acc_ref: (tm, tn) f32 accumulator (VMEM scratch)
    k = pl.program_id(2)

    @pl.when(k == 0)
    def _init():
        # Fold the bias into the accumulator init -> no separate epilogue add.
        acc_ref[...] = pl.broadcast_to(
            b_ref[...].astype(jnp.float32), acc_ref.shape)

    acc_ref[...] += jnp.dot(h_ref[...], w_ref[...],
                            preferred_element_type=jnp.float32)

    @pl.when(k == pl.num_programs(2) - 1)
    def _finalize():
        o_ref[...] = acc_ref[...].astype(o_ref.dtype)


# --------------------------------------------------------------------------- #
# One-time parameter preparation (do NOT call per forward)
# --------------------------------------------------------------------------- #
def prepare_global_linear_params(weight, bias, *,
                                 compute_dtype=jnp.bfloat16,
                                 tk_max=2048, tn_max=256):
    """Transpose the PyTorch (out_features, in_features) weight to (K, N),
    zero-pad to lane-dense / tileable shapes, and cast to the compute dtype.
    Call once at init; reuse the returned params dict across forwards so the
    steady-state call is weight-read-only (no per-call pad / transpose)."""
    out_features, in_features = weight.shape

    # K (reduction) tiling: minimize padding; tk multiple of 128 when tiled.
    if in_features <= tk_max:
        tk, k_pad = in_features, in_features
    else:
        nk = _cdiv(in_features, tk_max)
        tk = _round_up(_cdiv(in_features, nk), 128)
        k_pad = nk * tk

    # N (lane) tiling: keep the output lane-dense (multiples of 128).
    n_pad = _round_up(out_features, 128)
    if n_pad <= tn_max:
        tn = n_pad
    else:
        nn = _cdiv(n_pad, tn_max)
        tn = _round_up(_cdiv(out_features, nn), 128)
        n_pad = nn * tn

    w_t = weight.astype(compute_dtype).T            # (K, N), one-time transpose
    if (k_pad, n_pad) != (in_features, out_features):
        w_t = jnp.pad(w_t, ((0, k_pad - in_features), (0, n_pad - out_features)))
    b_p = bias.astype(jnp.float32).reshape(1, out_features)
    if n_pad != out_features:
        b_p = jnp.pad(b_p, ((0, 0), (0, n_pad - out_features)))

    return dict(w=w_t, b=b_p,
                in_features=in_features, out_features=out_features,
                tk=tk, tn=tn, compute_dtype=compute_dtype)


# --------------------------------------------------------------------------- #
# Forward
# --------------------------------------------------------------------------- #
def global_linear_cond_net(h, params, *, x=None, tm_max=256,
                           out_dtype=None, force_pallas=False):
    """Equivalent to the PyTorch module forward:
        out = h @ weight.T + bias ; return out.view(bs, fs, 1, 1)
    (`x` is accepted and ignored, matching the module signature)."""
    del x  # unused by the original module as well
    w_p, b_p = params["w"], params["b"]
    in_features = params["in_features"]
    out_features = params["out_features"]
    tk, tn = params["tk"], params["tn"]
    compute_dtype = params["compute_dtype"]
    k_pad, n_pad = w_p.shape

    bs = h.shape[0]
    assert h.shape[1] == in_features
    out_dtype = out_dtype or h.dtype

    flops = 2 * bs * in_features * out_features

    # ---- tiny-problem dispatch: a pallas_call has O(us) fixed launch cost ----
    if not force_pallas and flops < (1 << 20):
        h_c = h.astype(compute_dtype)
        if k_pad != in_features:
            h_c = jnp.pad(h_c, ((0, 0), (0, k_pad - in_features)))
        out = jnp.dot(h_c, w_p, preferred_element_type=jnp.float32) + b_p
        out = out[:, :out_features].astype(out_dtype)
        return out.reshape(bs, out_features, 1, 1)

    # ---- M tiling: minimize padding, 8-aligned sublane tiles ----------------
    if bs <= tm_max:
        nm, tm, m_pad = 1, bs, bs
    else:
        nm = _cdiv(bs, tm_max)
        tm = _round_up(_cdiv(bs, nm), 8)
        m_pad = nm * tm

    nn = n_pad // tn
    nk = k_pad // tk

    # v7x: if everything collapsed to one grid point but there is real work,
    # split a "parallel" axis in two so both TensorCores get a block
    # (harmless no-op on single-TC v5e/v6e).
    if nm == 1 and nn == 1 and nk == 1 and flops >= (1 << 26):
        if n_pad % 256 == 0:
            nn, tn = 2, n_pad // 2
        elif bs >= 16:
            nm = 2
            tm = _round_up(_cdiv(bs, 2), 8)
            m_pad = 2 * tm

    # ---- per-call activation pad/cast (zero K padding is exact) -------------
    h_c = h.astype(compute_dtype)
    if (m_pad, k_pad) != (bs, in_features):
        h_c = jnp.pad(h_c, ((0, m_pad - bs), (0, k_pad - in_features)))

    grid = (nm, nn, nk)
    single_block = grid == (1, 1, 1)
    kernel = (_linear_bias_single_block_kernel if single_block
              else _linear_bias_tiled_kernel)
    scratch = [] if single_block else [pltpu.VMEM((tm, tn), jnp.float32)]

    cd_size = jnp.dtype(compute_dtype).itemsize
    out_size = jnp.dtype(out_dtype).itemsize
    cost = pl.CostEstimate(
        flops=2 * m_pad * k_pad * n_pad,
        transcendentals=0,
        bytes_accessed=(cd_size * (m_pad * k_pad + k_pad * n_pad)
                        + 4 * n_pad + out_size * m_pad * n_pad))

    # Double-buffered working set estimate; keep a margin, cap under v7x's
    # 64 MiB physical VMEM per TensorCore.
    est = (2 * (tm * tk + tk * tn) * cd_size      # inputs (double-buffered)
           + 2 * tn * 4                           # bias
           + 2 * tm * tn * out_size               # output
           + (0 if single_block else tm * tn * 4))
    vmem_limit = min(64 * 1024 * 1024, max(32 * 1024 * 1024, 2 * est))

    out_p = pl.pallas_call(
        kernel,
        out_shape=jax.ShapeDtypeStruct((m_pad, n_pad), out_dtype),
        grid_spec=pltpu.PrefetchScalarGridSpec(
            num_scalar_prefetch=0,
            grid=grid,
            in_specs=[
                pl.BlockSpec((tm, tk), lambda i, j, k: (i, k)),   # h       (M,K)
                pl.BlockSpec((tk, tn), lambda i, j, k: (k, j)),   # weight  (K,N)
                pl.BlockSpec((1, tn), lambda i, j, k: (0, j)),    # bias
            ],
            out_specs=pl.BlockSpec((tm, tn), lambda i, j, k: (i, j)),
            scratch_shapes=scratch,
        ),
        compiler_params=pltpu.CompilerParams(
            dimension_semantics=("parallel", "parallel", "arbitrary"),
            vmem_limit_bytes=vmem_limit),
        cost_estimate=cost,
    )(h_c, w_p, b_p)

    # Slice lane padding; if downstream only broadcasts (bs, fs, 1, 1), callers
    # could consume the padded slab directly and skip this HBM copy.
    out = out_p[:bs, :out_features]
    return out.reshape(bs, out_features, 1, 1)


# --------------------------------------------------------------------------- #
# Self-test
# --------------------------------------------------------------------------- #
if __name__ == "__main__":
    key = jax.random.PRNGKey(0)
    k_h, k_w, k_b, k_h2, k_w2, k_b2 = jax.random.split(key, 6)

    # --- deployed shape (bs=2, in=32, out=16): single-block fast path --------
    bs, in_f, out_f = 2, 32, 16
    bound = 1.0 / math.sqrt(in_f)
    weight = jax.random.uniform(k_w, (out_f, in_f), jnp.float32, -bound, bound)
    bias = jax.random.uniform(k_b, (out_f,), jnp.float32, -bound, bound)
    h = jax.random.normal(k_h, (bs, in_f), jnp.float32)

    params = prepare_global_linear_params(weight, bias)
    ref = (h @ weight.T + bias).reshape(bs, out_f, 1, 1)

    # Force the Pallas path once (the dispatcher would route this tiny shape
    # to fused XLA). bf16 inputs + f32 accumulation -> relaxed tolerance.
    out_pallas = jax.block_until_ready(
        global_linear_cond_net(h, params, force_pallas=True))
    assert out_pallas.shape == (bs, out_f, 1, 1)
    assert jnp.allclose(out_pallas, ref, atol=2e-2, rtol=2e-2)

    # Dispatcher path (XLA-fused fallback for tiny shapes).
    out_dispatch = jax.block_until_ready(global_linear_cond_net(h, params))
    assert jnp.allclose(out_dispatch, ref, atol=2e-2, rtol=2e-2)

    # --- tiled path: small tile maxima force a (2, 3, 3) grid with K/N pad ---
    bs2, in_f2, out_f2 = 16, 380, 300
    bound2 = 1.0 / math.sqrt(in_f2)
    w2 = jax.random.uniform(k_w2, (out_f2, in_f2), jnp.float32, -bound2, bound2)
    b2 = jax.random.uniform(k_b2, (out_f2,), jnp.float32, -bound2, bound2)
    h2 = jax.random.normal(k_h2, (bs2, in_f2), jnp.float32)

    params2 = prepare_global_linear_params(w2, b2, tk_max=128, tn_max=128)
    ref2 = (h2 @ w2.T + b2).reshape(bs2, out_f2, 1, 1)
    out2 = jax.block_until_ready(
        global_linear_cond_net(h2, params2, tm_max=8, force_pallas=True))
    assert out2.shape == (bs2, out_f2, 1, 1)
    assert jnp.allclose(out2, ref2, atol=3e-2, rtol=3e-2)

    print("KERNEL_OK")
</pallas_src>

<mosaic_0001>
module attributes {stable_mosaic.version = 11 : i64} {
  func.func @_linear_bias_single_block_kernel(%arg0: i32, %arg1: i32, %arg2: i32, %arg3: memref<2x32xbf16, #tpu.memory_space<vmem>>, %arg4: memref<32x128xbf16, #tpu.memory_space<vmem>>, %arg5: memref<1x128xf32, #tpu.memory_space<vmem>>, %arg6: memref<2x128xf32, #tpu.memory_space<vmem>>) attributes {dimension_semantics = [#tpu.dimension_semantics<parallel>, #tpu.dimension_semantics<parallel>, #tpu.dimension_semantics<arbitrary>], iteration_bounds = array<i64: 1, 1, 1>, scalar_prefetch = 0 : i64, scratch_operands = 0 : i64, tpu.core_type = #tpu.core_type<tc>, window_params = [{transform_indices = @transform_0, window_bounds = array<i64: 2, 32>}, {transform_indices = @transform_1, window_bounds = array<i64: 32, 128>}, {transform_indices = @transform_2, window_bounds = array<i64: 1, 128>}, {transform_indices = @transform_3, window_bounds = array<i64: 2, 128>}]} {
    %c0 = arith.constant 0 : index
    %c0_0 = arith.constant 0 : index
    %0 = vector.load %arg3[%c0, %c0_0] : memref<2x32xbf16, #tpu.memory_space<vmem>>, vector<2x32xbf16>
    %c0_1 = arith.constant 0 : index
    %c0_2 = arith.constant 0 : index
    %1 = vector.load %arg4[%c0_1, %c0_2] : memref<32x128xbf16, #tpu.memory_space<vmem>>, vector<32x128xbf16>
    %cst = arith.constant dense<0.000000e+00> : vector<2x128xf32>
    %2 = tpu.matmul %0, %1, %cst {dimension_numbers = #tpu.dot_dimension_numbers<[1], [0], [0], [1], [0, 0, 1, 1], [], []>} : vector<2x32xbf16>, vector<32x128xbf16>, vector<2x128xf32> -> vector<2x128xf32>
    %c0_3 = arith.constant 0 : index
    %c0_4 = arith.constant 0 : index
    %3 = vector.load %arg5[%c0_3, %c0_4] : memref<1x128xf32, #tpu.memory_space<vmem>>, vector<1x128xf32>
    %4 = vector.broadcast %3 : vector<1x128xf32> to vector<2x128xf32>
    %5 = arith.addf %2, %4 : vector<2x128xf32>
    %c0_5 = arith.constant 0 : index
    %c0_6 = arith.constant 0 : index
    %6 = vector.load %arg6[%c0_5, %c0_6] : memref<2x128xf32, #tpu.memory_space<vmem>>, vector<2x128xf32>
    tpu.vector_store %arg6[%c0_5, %c0_6], %5 {strides = array<i32>} : memref<2x128xf32, #tpu.memory_space<vmem>>, vector<2x128xf32>,
    return
  }
  func.func @transform_0(%arg0: i32, %arg1: i32, %arg2: i32) -> (i32, i32) {
    %c0_i32 = arith.constant 0 : i32
    return %arg0, %arg2 : i32, i32
  }
  func.func @transform_1(%arg0: i32, %arg1: i32, %arg2: i32) -> (i32, i32) {
    %c0_i32 = arith.constant 0 : i32
    return %arg2, %arg1 : i32, i32
  }
  func.func @transform_2(%arg0: i32, %arg1: i32, %arg2: i32) -> (i32, i32) {
    %c0_i32 = arith.constant 0 : i32
    %c0_i32_0 = arith.constant 0 : i32
    return %c0_i32, %arg1 : i32, i32
  }
  func.func @transform_3(%arg0: i32, %arg1: i32, %arg2: i32) -> (i32, i32) {
    %c0_i32 = arith.constant 0 : i32
    return %arg0, %arg1 : i32, i32
  }
}

</mosaic_0001>

<llo_original>
// kernel: tpu_custom_call.1
$region0: #{tpu_custom_call.1}
  #allocation0 [shape = 'u32[]', space=smem, size = 0x4, offset = 0x4, fixed_abs, tag = 'smem constant byte address 0x4 - core index']
  #allocation1 [shape = 'u32[144,128]{1,0:T(1,128)}', space=vmem, size = 0x12000, scoped, tag = 'internal scratch']
  %s0 = inlined_call_operand.hbm [shape: bf16[2,32], index: 0, kind: input, shape index: {}]
  %s1 = inlined_call_operand.hbm [shape: bf16[32,128], index: 1, kind: input, shape index: {}]
  %s2 = inlined_call_operand.vmem [shape: f32[1,128], index: 2, kind: input, shape index: {}]
  %s3 = inlined_call_operand.hbm [shape: f32[2,128], index: 3, kind: output, shape index: {}]
  %s4 = sld [smem:[#allocation0]]
  $region30: #{tpu_custom_call.1} parent=0
    _
  %s6 = ssub.s32 1, %s4
  %s7 = scalar_select 0, %s6, %s4
  $region1: #{tpu_custom_call.1} parent=0
    #allocation2 [shape = 'u8[512]{0}', space=vmem, size = 0x400, scoped, tag = 'input window, operand 0, single buffered']
    #allocation3 [shape = 's32[1]{0}', space=sflag, size = 0x4, scoped, tag = 'scoped memory for tpu_custom_call.1']
    #allocation4 [shape = 's32[1]{0}', space=sflag, size = 0x4, scoped, tag = 'scoped memory for tpu_custom_call.1']
    #allocation5 [shape = 'u8[8192]{0}', space=vmem, size = 0x2000, scoped, tag = 'input window, operand 1, single buffered']
    #allocation6 [shape = 's32[1]{0}', space=sflag, size = 0x4, scoped, tag = 'scoped memory for tpu_custom_call.1']
    #allocation7 [shape = 'u8[1024]{0}', space=vmem, size = 0x400, scoped, tag = 'output window, operand 0, single buffered']
    %8 = vsyncpa [#allocation3], 0
    %9 = vsyncpa [#allocation6], 0
    %10 = vsyncpa [#allocation4], 0
    // Predicated region
    $region2: #{tpu_custom_call.1} parent=1 // pred_check
      _
    $region3: #{tpu_custom_call.1} parent=1 // pred_check_branch
      %12 = sbr.rel (0) target = $region5
    $region4: #{tpu_custom_call.1} parent=1 // pred_region
      %s14 = ssub.s32 16, 16
      %15 = vsyncadd [#allocation3], %s14
      %s17 = sshll.u32 [#allocation2], 4
      %s18 = int_to_ptr.vmem [resolvable:$true] %s17
      %20 = dma.hbm_to_vmem [thread:$0]  %s0, 16, %s18, [#allocation3]
    $region5: #{tpu_custom_call.1} parent=1 // pred_fallthru
      _
    // Predicated region
    $region6: #{tpu_custom_call.1} parent=1 // pred_check
      _
    $region7: #{tpu_custom_call.1} parent=1 // pred_check_branch
      %22 = sbr.rel (0) target = $region9
    $region8: #{tpu_custom_call.1} parent=1 // pred_region
      %s24 = ssub.s32 256, 256
      %25 = vsyncadd [#allocation6], %s24
      %s26 = sshll.u32 [#allocation5], 4
      %s27 = int_to_ptr.vmem [resolvable:$true] %s26
      %32 = dma.hbm_to_vmem [thread:$0]  %s1, 256, %s27, [#allocation6], 64, 64, 4
    $region9: #{tpu_custom_call.1} parent=1 // pred_fallthru
      _
    // Predicated region
    $region10: #{tpu_custom_call.1} parent=1 // pred_check
      _
    $region11: #{tpu_custom_call.1} parent=1 // pred_check_branch
      %34 = sbr.rel (0) target = $region13
    $region12: #{tpu_custom_call.1} parent=1 // pred_region
      _
    $region13: #{tpu_custom_call.1} parent=1 // pred_fallthru
      _
    // Predicated region
    $region14: #{tpu_custom_call.1} parent=1 // pred_check
      _
    $region15: #{tpu_custom_call.1} parent=1 // pred_check_branch
      %36 = sbr.rel (0) target = $region17
    $region16: #{tpu_custom_call.1} parent=1 // pred_region
      %37 = dma.done [#allocation3], 16
    $region17: #{tpu_custom_call.1} parent=1 // pred_fallthru
      _
    // Predicated region
    $region18: #{tpu_custom_call.1} parent=1 // pred_check
      _
    $region19: #{tpu_custom_call.1} parent=1 // pred_check_branch
      %39 = sbr.rel (0) target = $region21
    $region20: #{tpu_custom_call.1} parent=1 // pred_region
      %40 = dma.done [#allocation6], 256
    $region21: #{tpu_custom_call.1} parent=1 // pred_fallthru
      _
    %v42 = vld [vmem:[#allocation2] sm:$0x1]
    %v43 = vld [vmem:[#allocation5] sm:$0xf]
    %v44 = vld [vmem:[#allocation5 + $0x4] sm:$0xf]
    %v45 = vld [vmem:[#allocation5 + $0x8] sm:$0xf]
    %v46 = vld [vmem:[#allocation5 + $0xc] sm:$0xf]
    %v47 = vld [vmem:[%s2] sm:$0x1]
    %v49 = vlaneseq
    %v50 = vshrl.u32 %v49, 7
    %v51 = vsub.s32 0, %v50
    %v52 = vrot.slane %v47, %v51
    %v58 = vunpack.c.l.b16 %v43
    %v59 = vunpack.c.l.b16 %v44
    %v60 = vunpack.c.l.b16 %v45
    %v61 = vunpack.c.l.b16 %v46
    %v62 = vpack.c.b16 %v59, %v58
    %v63 = vpack.c.b16 %v61, %v60
    %vm66 = vcmask 261120
    %v68 = vsel %vm66, %v42, 0
    %70 = vmatprep.subr.bf16.mxu0 0
    %71 = vmatpush1.bf16.msra.mxu0 %v62
    %72 = vmatprep.subr.bf16.mxu0 0
    %73 = vmatpush1.bf16.msra.mxu0 %v63
    %74 = vmatprep.subr.bf16.mxu0 0
    %75 = vmatpush1.bf16.msra.mxu0 0
    %76 = vmatprep.subr.bf16.mxu0 0
    %77 = vmatpush1.bf16.msra.mxu0 0
    %78 = vmatprep.subr.bf16.mxu0 0
    %79 = vmatpush1.bf16.msra.mxu0 0
    %80 = vmatprep.subr.bf16.mxu0 0
    %81 = vmatpush1.bf16.msra.mxu0 0
    %82 = vmatprep.subr.bf16.mxu0 0
    %83 = vmatpush1.bf16.msra.mxu0 0
    %84 = vmatprep.subr.bf16.mxu0 0
    %85 = vmatpush1.bf16.msra.mxu0 0
    %86 = vmatprep.subr.bf16.mxu0 0
    %87 = vmatpush1.bf16.msra.mxu0 0
    %88 = vmatprep.subr.bf16.mxu0 0
    %89 = vmatpush1.bf16.msra.mxu0 0
    %90 = vmatprep.subr.bf16.mxu0 0
    %91 = vmatpush1.bf16.msra.mxu0 0
    %92 = vmatprep.subr.bf16.mxu0 0
    %93 = vmatpush1.bf16.msra.mxu0 0
    %94 = vmatprep.subr.bf16.mxu0 0
    %95 = vmatpush1.bf16.msra.mxu0 0
    %96 = vmatprep.subr.bf16.mxu0 0
    %97 = vmatpush1.bf16.msra.mxu0 0
    %98 = vmatprep.subr.bf16.mxu0 0
    %99 = vmatpush1.bf16.msra.mxu0 0
    %100 = vmatprep.subr.bf16.mxu0 0
    %101 = vmatpush1.bf16.msra.mxu0 0
    %102 = vmatprep.mubr.bf16.mxu0 0
    %103 = vmatmul.mubr.bf16.gmra.mrb[0].mxu0 %v68
    %v104 = vpop.f32.mrb[0].mxu0
    %v105 = vadd.f32 %v52, %v104
    %v106 = vpop.f32.mrb[0].mxu0
    %v107 = vpop.f32.mrb[0].mxu0
    %v108 = vpop.f32.mrb[0].mxu0
    %109 = vdwg.mxu0
    %110 = vst [vmem:[#allocation7] sm:$0x3] %v105
    // Predicated region
    $region22: #{tpu_custom_call.1} parent=1 // pred_check
      _
    $region23: #{tpu_custom_call.1} parent=1 // pred_check_branch
      %112 = sbr.rel (0) target = $region25
    $region24: #{tpu_custom_call.1} parent=1 // pred_region
      %s114 = ssub.s32 32, 32
      %115 = vsyncadd [#allocation4], %s114
      %s117 = sshll.u32 [#allocation7], 4
      %s118 = int_to_ptr.vmem [resolvable:$true] %s117
      %120 = dma.vmem_to_hbm [thread:$0]  %s118, 32, %s3, [#allocation4]
    $region25: #{tpu_custom_call.1} parent=1 // pred_fallthru
      _
    // Predicated region
    $region26: #{tpu_custom_call.1} parent=1 // pred_check
      _
    $region27: #{tpu_custom_call.1} parent=1 // pred_check_branch
      %122 = sbr.rel (0) target = $region29
    $region28: #{tpu_custom_call.1} parent=1 // pred_region
      %123 = dma.done [#allocation4], 32
    $region29: #{tpu_custom_call.1} parent=1 // pred_fallthru
      _
    %124 = vsyncpa [#allocation3], 1
    %125 = vsyncpa [#allocation6], 1
    %126 = vsyncpa [#allocation4], 1

</llo_original>
